<compile_context>
chip_gen: v5e
topology: v5e:2x2
jax: 0.10.0
libtpu: 0.0.40
codegen_flags: <defaults>
</compile_context>

<pallas_src>
import math

import jax
import jax.numpy as jnp
from jax.experimental import pallas as pl
from jax.experimental.pallas import tpu as pltpu


_TARGET_BLOCK_BYTES = 4 << 20   # ~4 MiB per block: fewer grid steps, near HBM roofline
_VMEM_LIMIT_BYTES = 32 << 20    # 4 double-buffered 4 MiB tiles = 16 MiB, 2x headroom
_FAST_PATH_BYTES = 256 << 10    # below this, pallas launch overhead > copy time


def _copy_kernel(x_ref, o_ref):
    # Whole-tile VMEM load + store (identity).
    o_ref[...] = x_ref[...]


def _sublane_multiple(dtype) -> int:
    """Sublane packing granularity: 8 for 32-bit, 16 for 16-bit, 32 for 8-bit."""
    itemsize = jnp.dtype(dtype).itemsize
    return max(8, 32 // max(itemsize, 1))


def _identity_copy_pallas_impl(x):
    """Materialized identity copy through a Pallas TPU kernel (no pad/slice)."""
    orig_shape = x.shape
    dtype = x.dtype
    itemsize = jnp.dtype(dtype).itemsize
    total = math.prod(orig_shape) if orig_shape else 1

    if total == 0:
        return x

    if total % 128 == 0:
        # Lane-dense tiled copy over a 1-D "parallel" grid.
        lanes = next(c for c in (1024, 512, 256, 128) if total % c == 0)
        rows = total // lanes
        x2d = x.reshape(rows, lanes)

        sub = _sublane_multiple(dtype)
        # ~4 MiB tiles, rounded to the dtype's sublane packing.
        tile_r = max(sub, (_TARGET_BLOCK_BYTES // (lanes * itemsize)) // sub * sub)
        # Keep at least 2 blocks for mid-size inputs so both v7x TCs get work.
        if tile_r >= rows and rows > sub:
            tile_r = max(sub, ((pl.cdiv(rows, 2) + sub - 1) // sub) * sub)
        tile_r = min(tile_r, rows)           # tile_r == rows is always legal
        grid = (pl.cdiv(rows, tile_r),)      # last block may be partial (masked)

        out2d = pl.pallas_call(
            _copy_kernel,
            out_shape=jax.ShapeDtypeStruct((rows, lanes), dtype),
            grid_spec=pl.GridSpec(
                grid=grid,
                in_specs=[pl.BlockSpec((tile_r, lanes), lambda i: (i, 0))],
                out_specs=pl.BlockSpec((tile_r, lanes), lambda i: (i, 0)),
            ),
            # Identity needs no fresh HBM buffer when the caller donates x.
            input_output_aliases={0: 0},
            compiler_params=pltpu.CompilerParams(
                dimension_semantics=("parallel",),     # megacore-shardable
                vmem_limit_bytes=_VMEM_LIMIT_BYTES,
            ),
            cost_estimate=pl.CostEstimate(
                flops=0,
                transcendentals=0,
                bytes_accessed=2 * total * itemsize,
            ),
        )(x2d)
        return out2d.reshape(orig_shape)

    # Fallback for element counts that are not a multiple of 128: one
    # full-extent block (always satisfies the layout rules; no padding,
    # no masked grid).  Fine for the odd-sized tensors this module sees;
    # very large non-128-multiple tensors would not fit a single VMEM block.
    x2d = x.reshape(1, total)
    out2d = pl.pallas_call(
        _copy_kernel,
        out_shape=jax.ShapeDtypeStruct((1, total), dtype),
        in_specs=[pl.BlockSpec(memory_space=pltpu.MemorySpace.VMEM)],
        out_specs=pl.BlockSpec(memory_space=pltpu.MemorySpace.VMEM),
        input_output_aliases={0: 0},
        cost_estimate=pl.CostEstimate(
            flops=0, transcendentals=0, bytes_accessed=2 * total * itemsize),
    )(x2d)
    return out2d.reshape(orig_shape)


_identity_copy_pallas = jax.jit(_identity_copy_pallas_impl)


def dnn_forward(x):
    """Pallas implementation of DNN.forward: out = x (same shape/dtype/values).

    For tiny inputs the identity is returned directly (zero HBM traffic); for
    larger inputs a lane-dense tiled Pallas copy runs at HBM roofline.  Callers
    that can donate `x` (jax.jit(..., donate_argnums=...)) get the copy elided
    via the input/output alias.
    """
    total = math.prod(x.shape) if x.shape else 1
    if total * jnp.dtype(x.dtype).itemsize <= _FAST_PATH_BYTES:
        return x
    return _identity_copy_pallas(x)


if __name__ == "__main__":
    key = jax.random.PRNGKey(0)
    # Small MNIST-like NCHW input: batch=2, channels=4, spatial=16x16
    # (2048 elements — a multiple of 128, exercises the lane-dense grid path
    # when the Pallas path is forced below).
    x = jax.random.normal(key, (2, 4, 16, 16), dtype=jnp.float32)

    # Public forward: tiny input takes the no-copy fast path.
    out = jax.block_until_ready(dnn_forward(x))
    assert out.shape == x.shape and out.dtype == x.dtype
    assert bool(jnp.array_equal(out, x))

    # Force the Pallas kernel path so the tiled copy compiles & runs on TPU.
    out_k = jax.block_until_ready(_identity_copy_pallas(x))
    assert out_k.shape == x.shape and out_k.dtype == x.dtype
    assert bool(jnp.array_equal(out_k, x))

    # Odd-sized input (element count not a multiple of 128) -> full-block path.
    y = jax.random.normal(jax.random.PRNGKey(0), (3, 5, 7), dtype=jnp.float32)
    out_y = jax.block_until_ready(_identity_copy_pallas(y))
    assert out_y.shape == y.shape and bool(jnp.array_equal(out_y, y))

    print("KERNEL_OK")
</pallas_src>

<mosaic_0001>
module attributes {stable_mosaic.version = 11 : i64} {
  func.func @_copy_kernel(%arg0: i32, %arg1: memref<2x1024xf32, #tpu.memory_space<vmem>>, %arg2: memref<2x1024xf32, #tpu.memory_space<vmem>>) attributes {dimension_semantics = [#tpu.dimension_semantics<parallel>], iteration_bounds = array<i64: 1>, scalar_prefetch = 0 : i64, scratch_operands = 0 : i64, tpu.core_type = #tpu.core_type<tc>, window_params = [{transform_indices = @transform_0, window_bounds = array<i64: 2, 1024>}, {transform_indices = @transform_1, window_bounds = array<i64: 2, 1024>}]} {
    %c0 = arith.constant 0 : index
    %c0_0 = arith.constant 0 : index
    %0 = vector.load %arg1[%c0, %c0_0] : memref<2x1024xf32, #tpu.memory_space<vmem>>, vector<2x1024xf32>
    %c0_1 = arith.constant 0 : index
    %c0_2 = arith.constant 0 : index
    %1 = vector.load %arg2[%c0_1, %c0_2] : memref<2x1024xf32, #tpu.memory_space<vmem>>, vector<2x1024xf32>
    tpu.vector_store %arg2[%c0_1, %c0_2], %0 {strides = array<i32>} : memref<2x1024xf32, #tpu.memory_space<vmem>>, vector<2x1024xf32>,
    return
  }
  func.func @transform_0(%arg0: i32) -> (i32, i32) {
    %c0_i32 = arith.constant 0 : i32
    %c0_i32_0 = arith.constant 0 : i32
    return %arg0, %c0_i32 : i32, i32
  }
  func.func @transform_1(%arg0: i32) -> (i32, i32) {
    %c0_i32 = arith.constant 0 : i32
    %c0_i32_0 = arith.constant 0 : i32
    return %arg0, %c0_i32 : i32, i32
  }
}

</mosaic_0001>

<llo_original>
// kernel: _identity_copy_pallas_impl.1
$region0: #{_identity_copy_pallas_impl.1}
  #allocation0 [shape = 'u32[]', space=smem, size = 0x4, offset = 0x4, fixed_abs, tag = 'smem constant byte address 0x4 - core index']
  #allocation1 [shape = 'u32[72,128]{1,0:T(1,128)}', space=vmem, size = 0x9000, scoped, tag = 'internal scratch']
  %s0 = inlined_call_operand.vmem [shape: f32[2,1024], index: 0, kind: input, shape index: {}, may-alias: {0,1}]
  %s1 = inlined_call_operand.vmem [shape: f32[2,1024], index: 1, kind: output, shape index: {}, may-alias: {0,1}]
  %s2 = sld [smem:[#allocation0]]
  $region14: #{_identity_copy_pallas_impl.1} parent=0
    _
  %s4 = ssub.s32 1, %s2
  %s5 = scalar_select 0, %s4, %s2
  // Predicated region
  $region2: #{_identity_copy_pallas_impl.1} parent=0 // pred_check
    _
  $region3: #{_identity_copy_pallas_impl.1} parent=0 // pred_check_branch
    %7 = sbr.rel (0) target = $region5
  $region4: #{_identity_copy_pallas_impl.1} parent=0 // pred_region
    _
  $region5: #{_identity_copy_pallas_impl.1} parent=0 // pred_fallthru
    _
  %v8 = vld [vmem:[%s0] sm:$0xff]
  %v9 = vld [vmem:[%s0 + $0x8] sm:$0xff]
  %10 = vst [vmem:[%s1] sm:$0xff] %v8
  %11 = vst [vmem:[%s1 + $0x8] sm:$0xff] %v9
  // Predicated region
  $region6: #{_identity_copy_pallas_impl.1} parent=0 // pred_check
    _
  $region7: #{_identity_copy_pallas_impl.1} parent=0 // pred_check_branch
    %13 = sbr.rel (0) target = $region9
  $region8: #{_identity_copy_pallas_impl.1} parent=0 // pred_region
    _
  $region9: #{_identity_copy_pallas_impl.1} parent=0 // pred_fallthru
    _
  // Predicated region
  $region10: #{_identity_copy_pallas_impl.1} parent=0 // pred_check
    _
  $region11: #{_identity_copy_pallas_impl.1} parent=0 // pred_check_branch
    %15 = sbr.rel (0) target = $region13
  $region12: #{_identity_copy_pallas_impl.1} parent=0 // pred_region
    _
  $region13: #{_identity_copy_pallas_impl.1} parent=0 // pred_fallthru
    _

</llo_original>
